<compile_context>
chip_gen: v5e
topology: v5e:2x2
jax: 0.10.0
libtpu: 0.0.40
codegen_flags: <defaults>
</compile_context>

<pallas_src>
import math

import jax
import jax.numpy as jnp
from jax import lax
from jax.experimental import pallas as pl
from jax.experimental.pallas import tpu as pltpu


def _attention_kernel(x_ref, wq_ref, wk_ref, wv_ref, wproj_ref, bproj_ref,
                      o_ref, acc_ref):
    # x_ref:     (N, C)   one batch element (leading batch dim squeezed)
    # wq/wk/wv:  (C, hd)  per-head projection weights (scale folded into wq)
    # wproj_ref: (hd, C)  per-head slice of the output projection
    # bproj_ref: (1, C)   proj bias (f32)
    # o_ref:     (N, C)   output block (resident across the head axis)
    # acc_ref:   (N, C)   f32 accumulator scratch
    h = pl.program_id(1)

    @pl.when(h == 0)
    def _():
        # Seed the accumulator with the projection bias -> no epilogue add.
        acc_ref[...] = (jnp.zeros_like(acc_ref)
                        + bproj_ref[...].astype(jnp.float32))

    dt = x_ref.dtype
    x = x_ref[...]                                               # (N, C) native dtype

    # Per-head q/k/v projections (MXU, native operands, f32 accumulation).
    q = jnp.dot(x, wq_ref[...], preferred_element_type=jnp.float32).astype(dt)
    k = jnp.dot(x, wk_ref[...], preferred_element_type=jnp.float32).astype(dt)
    v = jnp.dot(x, wv_ref[...], preferred_element_type=jnp.float32).astype(dt)

    # Scores: contract on head_dim directly (no explicit transpose of k).
    s = lax.dot_general(q, k, (((1,), (1,)), ((), ())),
                        preferred_element_type=jnp.float32)      # (N, N) f32

    # Numerically-stable softmax in f32 (matches torch softmax semantics).
    s = s - jnp.max(s, axis=-1, keepdims=True)
    p = jnp.exp(s)
    p = p * pl.reciprocal(jnp.sum(p, axis=-1, keepdims=True), approx=True)

    # Head context, then fuse this head's output projection into the
    # accumulator (no concat of head outputs).
    ctx = jnp.dot(p.astype(dt), v, preferred_element_type=jnp.float32).astype(dt)
    acc_ref[...] += jnp.dot(ctx, wproj_ref[...],
                            preferred_element_type=jnp.float32)  # (N, C) f32

    @pl.when(h == pl.num_programs(1) - 1)
    def _():
        o_ref[...] = acc_ref[...].astype(o_ref.dtype)


def attention_forward(x, wq, wk, wv, wproj, bproj):
    """x: (B, N, C); wq/wk/wv: (H, C, hd); wproj: (H, hd, C); bproj: (1, C)."""
    B, N, C = x.shape
    H, _, hd = wq.shape
    return pl.pallas_call(
        _attention_kernel,
        out_shape=jax.ShapeDtypeStruct((B, N, C), x.dtype),
        grid=(B, H),
        in_specs=[
            pl.BlockSpec((None, N, C), lambda b, h: (b, 0, 0)),   # x (refetched only on new b)
            pl.BlockSpec((None, C, hd), lambda b, h: (h, 0, 0)),  # wq (per-head slice)
            pl.BlockSpec((None, C, hd), lambda b, h: (h, 0, 0)),  # wk
            pl.BlockSpec((None, C, hd), lambda b, h: (h, 0, 0)),  # wv
            pl.BlockSpec((None, hd, C), lambda b, h: (h, 0, 0)),  # wproj per-head slice
            pl.BlockSpec((1, C), lambda b, h: (0, 0)),            # bias (tiny, constant)
        ],
        out_specs=pl.BlockSpec((None, N, C), lambda b, h: (b, 0, 0)),
        scratch_shapes=[pltpu.VMEM((N, C), jnp.float32)],
        compiler_params=pltpu.CompilerParams(
            dimension_semantics=("parallel", "arbitrary"),
            vmem_limit_bytes=32 * 1024 * 1024),
    )(x, wq, wk, wv, wproj, bproj)


def prepare_params(w_qkv_t, w_proj_t, b_proj, *, num_heads, scale,
                   param_dtype=None):
    """Split (C,3C)/(C,C) Linear weights into per-head slices for the kernel.

    w_qkv_t: (C, 3C) = qkv weight pre-transposed to (in, out), no bias.
    w_proj_t: (C, C) proj weight pre-transposed.  b_proj: (C,).
    Folds `scale` into the Q weights.
    """
    C = w_qkv_t.shape[0]
    hd = C // num_heads
    wqkv = w_qkv_t.reshape(C, 3, num_heads, hd)          # out features = (3, H, hd)
    wq = jnp.transpose(wqkv[:, 0], (1, 0, 2)) * scale    # (H, C, hd), scale baked in
    wk = jnp.transpose(wqkv[:, 1], (1, 0, 2))            # (H, C, hd)
    wv = jnp.transpose(wqkv[:, 2], (1, 0, 2))            # (H, C, hd)
    wp = w_proj_t.reshape(num_heads, hd, C)              # (H, hd, C)
    bp = b_proj.reshape(1, C).astype(jnp.float32)        # bias kept f32
    if param_dtype is not None:
        wq, wk, wv, wp = (w.astype(param_dtype) for w in (wq, wk, wv, wp))
    return wq, wk, wv, wp, bp


def reference_attention(x, w_qkv_t, w_proj_t, b_proj, *, num_heads, scale):
    """Pure-JAX reference mirroring the PyTorch forward exactly."""
    B, N, C = x.shape
    hd = C // num_heads
    qkv = x @ w_qkv_t                                       # (B, N, 3C)
    qkv = qkv.reshape(B, N, 3, num_heads, hd).transpose(2, 0, 3, 1, 4)
    q, k, v = qkv[0], qkv[1], qkv[2]                        # (B, H, N, hd)
    attn = (q @ jnp.swapaxes(k, -2, -1)) * scale            # (B, H, N, N)
    attn = jax.nn.softmax(attn, axis=-1)
    out = (attn @ v).transpose(0, 2, 1, 3).reshape(B, N, C)
    return out @ w_proj_t + b_proj


if __name__ == "__main__":
    # Module config (dropouts default to 0.0 -> identity)
    dim = 32
    num_heads = 4
    head_dim = dim // num_heads
    scale = head_dim ** (-0.5)

    # Small input shape consistent with forward: (B, N, C)
    B, N, C = 2, 8, dim

    key = jax.random.PRNGKey(0)
    kx, kqkv, kp, kb = jax.random.split(key, 4)

    x = jax.random.normal(kx, (B, N, C), dtype=jnp.float32)

    # nn.Linear-style params: qkv weight (3C, C) no bias; proj weight (C, C)+bias.
    # Stored pre-transposed as (in, out).
    bound = 1.0 / math.sqrt(C)
    w_qkv_t = jax.random.uniform(kqkv, (C, 3 * C), jnp.float32, -bound, bound)
    w_proj_t = jax.random.uniform(kp, (C, C), jnp.float32, -bound, bound)
    b_proj = jax.random.uniform(kb, (C,), jnp.float32, -bound, bound)

    ref = reference_attention(x, w_qkv_t, w_proj_t, b_proj,
                              num_heads=num_heads, scale=scale)

    # --- f32 path ---
    wq, wk, wv, wp, bp = prepare_params(w_qkv_t, w_proj_t, b_proj,
                                        num_heads=num_heads, scale=scale)
    out = jax.block_until_ready(attention_forward(x, wq, wk, wv, wp, bp))
    assert out.shape == (B, N, C)
    # approx reciprocal in the softmax -> slightly loosened tolerance
    assert jnp.allclose(out, ref, atol=2e-2, rtol=2e-2), "f32 mismatch vs reference"

    # --- bf16 path (MXU-native operands, f32 accumulation/softmax) ---
    xb = x.astype(jnp.bfloat16)
    wqb, wkb, wvb, wpb, bpb = prepare_params(w_qkv_t, w_proj_t, b_proj,
                                             num_heads=num_heads, scale=scale,
                                             param_dtype=jnp.bfloat16)
    outb = jax.block_until_ready(attention_forward(xb, wqb, wkb, wvb, wpb, bpb))
    assert outb.shape == (B, N, C)
    assert jnp.allclose(outb.astype(jnp.float32), ref, atol=5e-2, rtol=5e-2), \
        "bf16 mismatch vs reference"

    print("KERNEL_OK")
</pallas_src>

<mosaic_0001>
module attributes {stable_mosaic.version = 11 : i64} {
  func.func @_attention_kernel(%arg0: i32, %arg1: i32, %arg2: memref<1x8x32xf32, #tpu.memory_space<vmem>>, %arg3: memref<1x32x8xf32, #tpu.memory_space<vmem>>, %arg4: memref<1x32x8xf32, #tpu.memory_space<vmem>>, %arg5: memref<1x32x8xf32, #tpu.memory_space<vmem>>, %arg6: memref<1x8x32xf32, #tpu.memory_space<vmem>>, %arg7: memref<1x32xf32, #tpu.memory_space<vmem>>, %arg8: memref<1x8x32xf32, #tpu.memory_space<vmem>>, %arg9: memref<8x32xf32, #tpu.memory_space<vmem>>) attributes {dimension_semantics = [#tpu.dimension_semantics<parallel>, #tpu.dimension_semantics<arbitrary>], iteration_bounds = array<i64: 2, 4>, scalar_prefetch = 0 : i64, scratch_operands = 1 : i64, tpu.core_type = #tpu.core_type<tc>, window_params = [{transform_indices = @transform_0, window_bounds = array<i64: 1, 8, 32>}, {transform_indices = @transform_1, window_bounds = array<i64: 1, 32, 8>}, {transform_indices = @transform_2, window_bounds = array<i64: 1, 32, 8>}, {transform_indices = @transform_3, window_bounds = array<i64: 1, 32, 8>}, {transform_indices = @transform_4, window_bounds = array<i64: 1, 8, 32>}, {pipeline_mode = #tpu.pipeline_mode<synchronous>, transform_indices = @transform_5, window_bounds = array<i64: 1, 32>}, {transform_indices = @transform_6, window_bounds = array<i64: 1, 8, 32>}]} {
    %c0_i32 = arith.constant 0 : i32
    %0 = arith.cmpi eq, %arg1, %c0_i32 : i32
    %1 = arith.extui %0 : i1 to i32
    %c0_i32_0 = arith.constant 0 : i32
    %2 = arith.cmpi ne, %1, %c0_i32_0 : i32
    scf.if %2 {
      %cst_27 = arith.constant 0.000000e+00 : f32
      %35 = vector.broadcast %cst_27 : f32 to vector<8x32xf32>
      %c0_28 = arith.constant 0 : index
      %c0_29 = arith.constant 0 : index
      %36 = vector.load %arg7[%c0_28, %c0_29] : memref<1x32xf32, #tpu.memory_space<vmem>>, vector<1x32xf32>
      %37 = vector.broadcast %36 : vector<1x32xf32> to vector<8x32xf32>
      %38 = arith.addf %35, %37 : vector<8x32xf32>
      %c0_30 = arith.constant 0 : index
      %c0_31 = arith.constant 0 : index
      %39 = vector.load %arg9[%c0_30, %c0_31] : memref<8x32xf32, #tpu.memory_space<vmem>>, vector<8x32xf32>
      tpu.vector_store %arg9[%c0_30, %c0_31], %38 {strides = array<i32>} : memref<8x32xf32, #tpu.memory_space<vmem>>, vector<8x32xf32>,
    } else {
    }
    %c0 = arith.constant 0 : index
    %c0_1 = arith.constant 0 : index
    %c0_2 = arith.constant 0 : index
    %3 = vector.load %arg2[%c0, %c0_1, %c0_2] : memref<1x8x32xf32, #tpu.memory_space<vmem>>, vector<1x8x32xf32>
    %4 = vector.shape_cast %3 : vector<1x8x32xf32> to vector<8x32xf32>
    %c0_3 = arith.constant 0 : index
    %c0_4 = arith.constant 0 : index
    %c0_5 = arith.constant 0 : index
    %5 = vector.load %arg3[%c0_3, %c0_4, %c0_5] : memref<1x32x8xf32, #tpu.memory_space<vmem>>, vector<1x32x8xf32>
    %6 = vector.shape_cast %5 : vector<1x32x8xf32> to vector<32x8xf32>
    %cst = arith.constant dense<0.000000e+00> : vector<8x8xf32>
    %7 = tpu.matmul %4, %6, %cst {dimension_numbers = #tpu.dot_dimension_numbers<[1], [0], [0], [1], [0, 0, 1, 1], [], []>} : vector<8x32xf32>, vector<32x8xf32>, vector<8x8xf32> -> vector<8x8xf32>
    %c0_6 = arith.constant 0 : index
    %c0_7 = arith.constant 0 : index
    %c0_8 = arith.constant 0 : index
    %8 = vector.load %arg4[%c0_6, %c0_7, %c0_8] : memref<1x32x8xf32, #tpu.memory_space<vmem>>, vector<1x32x8xf32>
    %9 = vector.shape_cast %8 : vector<1x32x8xf32> to vector<32x8xf32>
    %cst_9 = arith.constant dense<0.000000e+00> : vector<8x8xf32>
    %10 = tpu.matmul %4, %9, %cst_9 {dimension_numbers = #tpu.dot_dimension_numbers<[1], [0], [0], [1], [0, 0, 1, 1], [], []>} : vector<8x32xf32>, vector<32x8xf32>, vector<8x8xf32> -> vector<8x8xf32>
    %c0_10 = arith.constant 0 : index
    %c0_11 = arith.constant 0 : index
    %c0_12 = arith.constant 0 : index
    %11 = vector.load %arg5[%c0_10, %c0_11, %c0_12] : memref<1x32x8xf32, #tpu.memory_space<vmem>>, vector<1x32x8xf32>
    %12 = vector.shape_cast %11 : vector<1x32x8xf32> to vector<32x8xf32>
    %cst_13 = arith.constant dense<0.000000e+00> : vector<8x8xf32>
    %13 = tpu.matmul %4, %12, %cst_13 {dimension_numbers = #tpu.dot_dimension_numbers<[1], [0], [0], [1], [0, 0, 1, 1], [], []>} : vector<8x32xf32>, vector<32x8xf32>, vector<8x8xf32> -> vector<8x8xf32>
    %cst_14 = arith.constant dense<0.000000e+00> : vector<8x8xf32>
    %14 = tpu.matmul %7, %10, %cst_14 {dimension_numbers = #tpu.dot_dimension_numbers<[1], [1], [0], [0], [0, 0, 1, 0], [], []>} : vector<8x8xf32>, vector<8x8xf32>, vector<8x8xf32> -> vector<8x8xf32>
    %cst_15 = arith.constant dense<0xFF800000> : vector<8xf32>
    %15 = vector.multi_reduction <maximumf>, %14, %cst_15 [1] : vector<8x8xf32> to vector<8xf32>
    %16 = vector.shape_cast %15 : vector<8xf32> to vector<8x1xf32>
    %17 = vector.broadcast %16 : vector<8x1xf32> to vector<8x8xf32>
    %18 = arith.subf %14, %17 : vector<8x8xf32>
    %19 = math.exp %18 : vector<8x8xf32>
    %cst_16 = arith.constant dense<0.000000e+00> : vector<8xf32>
    %20 = vector.multi_reduction <add>, %19, %cst_16 [1] : vector<8x8xf32> to vector<8xf32>
    %21 = vector.shape_cast %20 : vector<8xf32> to vector<8x1xf32>
    %22 = tpu.reciprocal %21 {approx = true} : vector<8x1xf32> -> vector<8x1xf32>
    %23 = vector.broadcast %22 : vector<8x1xf32> to vector<8x8xf32>
    %24 = arith.mulf %19, %23 : vector<8x8xf32>
    %cst_17 = arith.constant dense<0.000000e+00> : vector<8x8xf32>
    %25 = tpu.matmul %24, %13, %cst_17 {dimension_numbers = #tpu.dot_dimension_numbers<[1], [0], [0], [1], [0, 0, 1, 1], [], []>} : vector<8x8xf32>, vector<8x8xf32>, vector<8x8xf32> -> vector<8x8xf32>
    %c0_18 = arith.constant 0 : index
    %c0_19 = arith.constant 0 : index
    %26 = vector.load %arg9[%c0_18, %c0_19] : memref<8x32xf32, #tpu.memory_space<vmem>>, vector<8x32xf32>
    %c0_20 = arith.constant 0 : index
    %c0_21 = arith.constant 0 : index
    %c0_22 = arith.constant 0 : index
    %27 = vector.load %arg6[%c0_20, %c0_21, %c0_22] : memref<1x8x32xf32, #tpu.memory_space<vmem>>, vector<1x8x32xf32>
    %28 = vector.shape_cast %27 : vector<1x8x32xf32> to vector<8x32xf32>
    %cst_23 = arith.constant dense<0.000000e+00> : vector<8x32xf32>
    %29 = tpu.matmul %25, %28, %cst_23 {dimension_numbers = #tpu.dot_dimension_numbers<[1], [0], [0], [1], [0, 0, 1, 1], [], []>} : vector<8x8xf32>, vector<8x32xf32>, vector<8x32xf32> -> vector<8x32xf32>
    %30 = arith.addf %26, %29 : vector<8x32xf32>
    %c0_24 = arith.constant 0 : index
    %c0_25 = arith.constant 0 : index
    %31 = vector.load %arg9[%c0_24, %c0_25] : memref<8x32xf32, #tpu.memory_space<vmem>>, vector<8x32xf32>
    tpu.vector_store %arg9[%c0_24, %c0_25], %30 {strides = array<i32>} : memref<8x32xf32, #tpu.memory_space<vmem>>, vector<8x32xf32>,
    %c3_i32 = arith.constant 3 : i32
    %32 = arith.cmpi eq, %arg1, %c3_i32 : i32
    %33 = arith.extui %32 : i1 to i32
    %c0_i32_26 = arith.constant 0 : i32
    %34 = arith.cmpi ne, %33, %c0_i32_26 : i32
    scf.if %34 {
      %c0_27 = arith.constant 0 : index
      %c0_28 = arith.constant 0 : index
      %35 = vector.load %arg9[%c0_27, %c0_28] : memref<8x32xf32, #tpu.memory_space<vmem>>, vector<8x32xf32>
      %c0_29 = arith.constant 0 : index
      %c0_30 = arith.constant 0 : index
      %c0_31 = arith.constant 0 : index
      %36 = vector.load %arg8[%c0_29, %c0_30, %c0_31] : memref<1x8x32xf32, #tpu.memory_space<vmem>>, vector<1x8x32xf32>
      %37 = vector.shape_cast %36 : vector<1x8x32xf32> to vector<8x32xf32>
      %38 = vector.shape_cast %35 : vector<8x32xf32> to vector<1x8x32xf32>
      tpu.vector_store %arg8[%c0_29, %c0_30, %c0_31], %38 {strides = array<i32>} : memref<1x8x32xf32, #tpu.memory_space<vmem>>, vector<1x8x32xf32>,
    } else {
    }
    return
  }
  func.func @transform_0(%arg0: i32, %arg1: i32) -> (i32, i32, i32) {
    %c0_i32 = arith.constant 0 : i32
    %c0_i32_0 = arith.constant 0 : i32
    %c0_i32_1 = arith.constant 0 : i32
    return %arg0, %c0_i32, %c0_i32_0 : i32, i32, i32
  }
  func.func @transform_1(%arg0: i32, %arg1: i32) -> (i32, i32, i32) {
    %c0_i32 = arith.constant 0 : i32
    %c0_i32_0 = arith.constant 0 : i32
    %c0_i32_1 = arith.constant 0 : i32
    return %arg1, %c0_i32, %c0_i32_0 : i32, i32, i32
  }
  func.func @transform_2(%arg0: i32, %arg1: i32) -> (i32, i32, i32) {
    %c0_i32 = arith.constant 0 : i32
    %c0_i32_0 = arith.constant 0 : i32
    %c0_i32_1 = arith.constant 0 : i32
    return %arg1, %c0_i32, %c0_i32_0 : i32, i32, i32
  }
  func.func @transform_3(%arg0: i32, %arg1: i32) -> (i32, i32, i32) {
    %c0_i32 = arith.constant 0 : i32
    %c0_i32_0 = arith.constant 0 : i32
    %c0_i32_1 = arith.constant 0 : i32
    return %arg1, %c0_i32, %c0_i32_0 : i32, i32, i32
  }
  func.func @transform_4(%arg0: i32, %arg1: i32) -> (i32, i32, i32) {
    %c0_i32 = arith.constant 0 : i32
    %c0_i32_0 = arith.constant 0 : i32
    %c0_i32_1 = arith.constant 0 : i32
    return %arg1, %c0_i32, %c0_i32_0 : i32, i32, i32
  }
  func.func @transform_5(%arg0: i32, %arg1: i32) -> (i32, i32) {
    %c0_i32 = arith.constant 0 : i32
    %c0_i32_0 = arith.constant 0 : i32
    %c0_i32_1 = arith.constant 0 : i32
    return %c0_i32, %c0_i32_0 : i32, i32
  }
  func.func @transform_6(%arg0: i32, %arg1: i32) -> (i32, i32, i32) {
    %c0_i32 = arith.constant 0 : i32
    %c0_i32_0 = arith.constant 0 : i32
    %c0_i32_1 = arith.constant 0 : i32
    return %arg0, %c0_i32, %c0_i32_0 : i32, i32, i32
  }
}

</mosaic_0001>

<llo_original>
// kernel: tpu_custom_call.1
$region0: #{tpu_custom_call.1}
  #allocation0 [shape = 'u32[]', space=smem, size = 0x4, offset = 0x4, fixed_abs, tag = 'smem constant byte address 0x4 - core index']
  #allocation1 [shape = 'u32[72,128]{1,0:T(1,128)}', space=vmem, size = 0x9000, scoped, tag = 'internal scratch']
  #allocation2 [shape = 'f32[8,32]{1,0:T(8,128)}', space=vmem, size = 0x1000, scoped, tag = 'scratch operand']
  %s0 = inlined_call_operand.vmem [shape: f32[2,8,32], index: 0, kind: input, shape index: {}]
  %s1 = inlined_call_operand.vmem [shape: f32[4,32,8], index: 1, kind: input, shape index: {}]
  %s2 = inlined_call_operand.vmem [shape: f32[4,32,8], index: 2, kind: input, shape index: {}]
  %s3 = inlined_call_operand.vmem [shape: f32[4,32,8], index: 3, kind: input, shape index: {}]
  %s4 = inlined_call_operand.vmem [shape: f32[4,8,32], index: 4, kind: input, shape index: {}]
  %s5 = inlined_call_operand.vmem [shape: f32[1,32], index: 5, kind: input, shape index: {}]
  %s6 = inlined_call_operand.hbm [shape: f32[2,8,32], index: 6, kind: output, shape index: {}]
  %s7 = sld [smem:[#allocation0]]
  $region65: #{tpu_custom_call.1} parent=0
    _
  %s9 = ssub.s32 1, %s7
  %s10 = scalar_select 0, %s9, %s7
  $region1: #{tpu_custom_call.1} parent=0
    #allocation3 [shape = 'u8[8192]{0}', space=vmem, size = 0x2000, scoped, tag = 'output window, operand 0']
    #allocation4 [shape = 's32[2]{0}', space=sflag, size = 0x8, scoped, tag = 'scoped memory for tpu_custom_call.1']
    %11 = vsyncpa [#allocation4], 0
    %s12 = scalar_lea.sflag [#allocation4], 1
    %13 = vsyncpa %s12, 0
    loop: start=0, step=1, limit=10
    $region2: #{tpu_custom_call.1} parent=1 // loop_pre_header
      _
    $region3: #{tpu_custom_call.1} parent=1 // loop_header
      %s15 = sphi 0, %s19
      %p16 = scmp.ge.s32.totalorder %s15, 10
      %s22 = sphi 0, %s34
      %s23 = sphi 0, %s30
      %s24 = sphi 0, %s22
      %s25 = sphi 0, %s23
      %s26 = sphi 0, %s24
      %s27 = sphi 0, %s25
      %s37 = sphi 0, %s39
      %s40 = sphi 0, %s37
      %s41 = sphi 0, %s40
      %s57 = sphi 0, %s41
      %s63 = sphi 0, %s65
      %s66 = sphi 0, %s63
      %s67 = sphi 0, %s66
      %s83 = sphi 0, %s67
      %s89 = sphi 0, %s91
      %s92 = sphi 0, %s89
      %s93 = sphi 0, %s92
      %s109 = sphi 0, %s93
      %s115 = sphi 0, %s117
      %s118 = sphi 0, %s115
      %s119 = sphi 0, %s118
      %s135 = sphi 0, %s119
      %s141 = sphi 0, %s143
      %s144 = sphi 0, %s141
      %s145 = sphi 0, %s144
      %s161 = sphi 0, %s145
      %s165 = sphi 0, %s165
      %s167 = sphi 0, %s165
      %s168 = sphi 0, %s167
      %s182 = sphi 0, %s168
      %s188 = sphi 0, %s190
      %s191 = sphi 0, %s188
      %s192 = sphi 0, %s191
      %s208 = sphi 0, %s192
    $region4: #{tpu_custom_call.1} parent=1 // loop_header_branch
      %18 = sbr.rel (%p16) target = $region8
    $region5: #{tpu_custom_call.1} parent=1 // loop_body
      %s20 = ssub.s32 %s15, 1
      %s21 = ssub.s32 %s15, 2
      %s28 = sadd.s32 1, %s23
      %p29 = scmp.ge.s32.totalorder %s28, 4
      %s30 = scalar_select %p29, 0, %s28
      %s31 = sadd.s32 1, %s22
      %s32 = scalar_select %p29, %s31, %s22
      %p33 = scmp.ge.s32.totalorder %s32, 2
      %s34 = scalar_select %p33, 0, %s32
      %s35 = ssub.s32 %s22, %s34
      %p36 = scmp.eq.s32.totalorder %s35, 0
      %s38 = sadd.s32 %s37, 1
      %s39 = scalar_select %p36, %s37, %s38
      %p42 = pneg %p36
      %p43 = scmp.eq.s32.totalorder %s15, 7
      %p44 = por %p42, %p43
      %p45 = scmp.ne.s32.totalorder %s37, %s40
      %p46 = scmp.eq.s32.totalorder %s15, 0
      %p47 = por %p45, %p46
      %p48 = scmp.ne.s32.totalorder %s37, %s40
      %p49 = scmp.eq.s32.totalorder %s20, 7
      %p50 = por %p48, %p49
      %p51 = scmp.ne.s32.totalorder %s40, %s41
      %p52 = scmp.eq.s32.totalorder %s20, 0
      %p53 = por %p51, %p52
      %p54 = scmp.ne.s32.totalorder %s40, %s41
      %p55 = scmp.eq.s32.totalorder %s21, 7
      %p56 = por %p54, %p55
      %p58 = scmp.ne.s32.totalorder %s41, %s57
      %p59 = scmp.eq.s32.totalorder %s21, 0
      %p60 = por %p58, %p59
      %s61 = ssub.s32 %s23, %s30
      %p62 = scmp.eq.s32.totalorder %s61, 0
      %s64 = sadd.s32 %s63, 1
      %s65 = scalar_select %p62, %s63, %s64
      %p68 = pneg %p62
      %p69 = scmp.eq.s32.totalorder %s15, 7
      %p70 = por %p68, %p69
      %p71 = scmp.ne.s32.totalorder %s63, %s66
      %p72 = scmp.eq.s32.totalorder %s15, 0
      %p73 = por %p71, %p72
      %p74 = scmp.ne.s32.totalorder %s63, %s66
      %p75 = scmp.eq.s32.totalorder %s20, 7
      %p76 = por %p74, %p75
      %p77 = scmp.ne.s32.totalorder %s66, %s67
      %p78 = scmp.eq.s32.totalorder %s20, 0
      %p79 = por %p77, %p78
      %p80 = scmp.ne.s32.totalorder %s66, %s67
      %p81 = scmp.eq.s32.totalorder %s21, 7
      %p82 = por %p80, %p81
      %p84 = scmp.ne.s32.totalorder %s67, %s83
      %p85 = scmp.eq.s32.totalorder %s21, 0
      %p86 = por %p84, %p85
      %s87 = ssub.s32 %s23, %s30
      %p88 = scmp.eq.s32.totalorder %s87, 0
      %s90 = sadd.s32 %s89, 1
      %s91 = scalar_select %p88, %s89, %s90
      %p94 = pneg %p88
      %p95 = scmp.eq.s32.totalorder %s15, 7
      %p96 = por %p94, %p95
      %p97 = scmp.ne.s32.totalorder %s89, %s92
      %p98 = scmp.eq.s32.totalorder %s15, 0
      %p99 = por %p97, %p98
      %p100 = scmp.ne.s32.totalorder %s89, %s92
      %p101 = scmp.eq.s32.totalorder %s20, 7
      %p102 = por %p100, %p101
      %p103 = scmp.ne.s32.totalorder %s92, %s93
      %p104 = scmp.eq.s32.totalorder %s20, 0
      %p105 = por %p103, %p104
      %p106 = scmp.ne.s32.totalorder %s92, %s93
      %p107 = scmp.eq.s32.totalorder %s21, 7
      %p108 = por %p106, %p107
      %p110 = scmp.ne.s32.totalorder %s93, %s109
      %p111 = scmp.eq.s32.totalorder %s21, 0
      %p112 = por %p110, %p111
      %s113 = ssub.s32 %s23, %s30
      %p114 = scmp.eq.s32.totalorder %s113, 0
      %s116 = sadd.s32 %s115, 1
      %s117 = scalar_select %p114, %s115, %s116
      %p120 = pneg %p114
      %p121 = scmp.eq.s32.totalorder %s15, 7
      %p122 = por %p120, %p121
      %p123 = scmp.ne.s32.totalorder %s115, %s118
      %p124 = scmp.eq.s32.totalorder %s15, 0
      %p125 = por %p123, %p124
      %p126 = scmp.ne.s32.totalorder %s115, %s118
      %p127 = scmp.eq.s32.totalorder %s20, 7
      %p128 = por %p126, %p127
      %p129 = scmp.ne.s32.totalorder %s118, %s119
      %p130 = scmp.eq.s32.totalorder %s20, 0
      %p131 = por %p129, %p130
      %p132 = scmp.ne.s32.totalorder %s118, %s119
      %p133 = scmp.eq.s32.totalorder %s21, 7
      %p134 = por %p132, %p133
      %p136 = scmp.ne.s32.totalorder %s119, %s135
      %p137 = scmp.eq.s32.totalorder %s21, 0
      %p138 = por %p136, %p137
      %s139 = ssub.s32 %s23, %s30
      %p140 = scmp.eq.s32.totalorder %s139, 0
      %s142 = sadd.s32 %s141, 1
      %s143 = scalar_select %p140, %s141, %s142
      %p146 = pneg %p140
      %p147 = scmp.eq.s32.totalorder %s15, 7
      %p148 = por %p146, %p147
      %p149 = scmp.ne.s32.totalorder %s141, %s144
      %p150 = scmp.eq.s32.totalorder %s15, 0
      %p151 = por %p149, %p150
      %p152 = scmp.ne.s32.totalorder %s141, %s144
      %p153 = scmp.eq.s32.totalorder %s20, 7
      %p154 = por %p152, %p153
      %p155 = scmp.ne.s32.totalorder %s144, %s145
      %p156 = scmp.eq.s32.totalorder %s20, 0
      %p157 = por %p155, %p156
      %p158 = scmp.ne.s32.totalorder %s144, %s145
      %p159 = scmp.eq.s32.totalorder %s21, 7
      %p160 = por %p158, %p159
      %p162 = scmp.ne.s32.totalorder %s145, %s161
      %p163 = scmp.eq.s32.totalorder %s21, 0
      %p164 = por %p162, %p163
      %s166 = sadd.s32 %s165, 1
      %p169 = scmp.eq.s32.totalorder %s15, 7
      %p170 = scmp.ne.s32.totalorder %s165, %s167
      %p171 = scmp.eq.s32.totalorder %s15, 0
      %p172 = por %p170, %p171
      %p173 = scmp.ne.s32.totalorder %s165, %s167
      %p174 = scmp.eq.s32.totalorder %s20, 7
      %p175 = por %p173, %p174
      %p176 = scmp.ne.s32.totalorder %s167, %s168
      %p177 = scmp.eq.s32.totalorder %s20, 0
      %p178 = por %p176, %p177
      %p179 = scmp.ne.s32.totalorder %s167, %s168
      %p180 = scmp.eq.s32.totalorder %s21, 7
      %p181 = por %p179, %p180
      %p183 = scmp.ne.s32.totalorder %s168, %s182
      %p184 = scmp.eq.s32.totalorder %s21, 0
      %p185 = por %p183, %p184
      %s186 = ssub.s32 %s22, %s34
      %p187 = scmp.eq.s32.totalorder %s186, 0
      %s189 = sadd.s32 %s188, 1
      %s190 = scalar_select %p187, %s188, %s189
      %p193 = pneg %p187
      %p194 = scmp.eq.s32.totalorder %s15, 7
      %p195 = por %p193, %p194
      %p196 = scmp.ne.s32.totalorder %s188, %s191
      %p197 = scmp.eq.s32.totalorder %s15, 0
      %p198 = por %p196, %p197
      %p199 = scmp.ne.s32.totalorder %s188, %s191
      %p200 = scmp.eq.s32.totalorder %s20, 7
      %p201 = por %p199, %p200
      %p202 = scmp.ne.s32.totalorder %s191, %s192
      %p203 = scmp.eq.s32.totalorder %s20, 0
      %p204 = por %p202, %p203
      %p205 = scmp.ne.s32.totalorder %s191, %s192
      %p206 = scmp.eq.s32.totalorder %s21, 7
      %p207 = por %p205, %p206
      %p209 = scmp.ne.s32.totalorder %s192, %s208
      %p210 = scmp.eq.s32.totalorder %s21, 0
      %p211 = por %p209, %p210
      %p212 = scmp.le.s32.totalorder 1, %s15
      %p213 = scmp.lt.s32.totalorder %s15, 9
      %p214 = pnand %p212, %p213
      %p215 = pneg %p214
      // Predicated region
      $region9: #{tpu_custom_call.1} parent=5 // pred_check
        _
      $region10: #{tpu_custom_call.1} parent=5 // pred_check_branch
        %217 = sbr.rel (%p214) target = $region12
      $region11: #{tpu_custom_call.1} parent=5 // pred_region
        %s218 = ssub.s32 %s15, 1
        // Predicated region
        $region13: #{tpu_custom_call.1} parent=11 // pred_check
          %p219 = pneg %p178
        $region14: #{tpu_custom_call.1} parent=11 // pred_check_branch
          %221 = sbr.rel (%p219) target = $region16
        $region15: #{tpu_custom_call.1} parent=11 // pred_region
          _
        $region16: #{tpu_custom_call.1} parent=11 // pred_fallthru
          _
      $region12: #{tpu_custom_call.1} parent=5 // pred_fallthru
        _
      %p222 = scmp.lt.s32.totalorder %s15, 8
      // Predicated region
      $region17: #{tpu_custom_call.1} parent=5 // pred_check
        %p223 = pneg %p222
      $region18: #{tpu_custom_call.1} parent=5 // pred_check_branch
        %225 = sbr.rel (%p223) target = $region20
      $region19: #{tpu_custom_call.1} parent=5 // pred_region
        // Predicated region
        $region21: #{tpu_custom_call.1} parent=19 // pred_check
          %p226 = pneg %p47
        $region22: #{tpu_custom_call.1} parent=19 // pred_check_branch
          %228 = sbr.rel (%p226) target = $region24
        $region23: #{tpu_custom_call.1} parent=19 // pred_region
          %p229 = scmp.lt.s32.totalorder %s22, 1
          %s230 = scalar_select %p229, %s22, 1
          %s231 = smul.addr %s230, 8
          %s232 = scalar_lea.vmem %s0, %s231
        $region24: #{tpu_custom_call.1} parent=19 // pred_fallthru
          _
        // Predicated region
        $region25: #{tpu_custom_call.1} parent=19 // pred_check
          %p233 = pneg %p73
        $region26: #{tpu_custom_call.1} parent=19 // pred_check_branch
          %235 = sbr.rel (%p233) target = $region28
        $region27: #{tpu_custom_call.1} parent=19 // pred_region
          %p236 = scmp.lt.s32.totalorder %s23, 3
          %s237 = scalar_select %p236, %s23, 3
          %s238 = smul.addr %s237, 4
          %s239 = smul.addr %s238, 8
          %s240 = scalar_lea.vmem %s1, %s239
        $region28: #{tpu_custom_call.1} parent=19 // pred_fallthru
          _
        // Predicated region
        $region29: #{tpu_custom_call.1} parent=19 // pred_check
          %p241 = pneg %p99
        $region30: #{tpu_custom_call.1} parent=19 // pred_check_branch
          %243 = sbr.rel (%p241) target = $region32
        $region31: #{tpu_custom_call.1} parent=19 // pred_region
          %p244 = scmp.lt.s32.totalorder %s23, 3
          %s245 = scalar_select %p244, %s23, 3
          %s246 = smul.addr %s245, 4
          %s247 = smul.addr %s246, 8
          %s248 = scalar_lea.vmem %s2, %s247
        $region32: #{tpu_custom_call.1} parent=19 // pred_fallthru
          _
        // Predicated region
        $region33: #{tpu_custom_call.1} parent=19 // pred_check
          %p249 = pneg %p125
        $region34: #{tpu_custom_call.1} parent=19 // pred_check_branch
          %251 = sbr.rel (%p249) target = $region36
        $region35: #{tpu_custom_call.1} parent=19 // pred_region
          %p252 = scmp.lt.s32.totalorder %s23, 3
          %s253 = scalar_select %p252, %s23, 3
          %s254 = smul.addr %s253, 4
          %s255 = smul.addr %s254, 8
          %s256 = scalar_lea.vmem %s3, %s255
        $region36: #{tpu_custom_call.1} parent=19 // pred_fallthru
          _
        // Predicated region
        $region37: #{tpu_custom_call.1} parent=19 // pred_check
          %p257 = pneg %p151
        $region38: #{tpu_custom_call.1} parent=19 // pred_check_branch
          %259 = sbr.rel (%p257) target = $region40
        $region39: #{tpu_custom_call.1} parent=19 // pred_region
          %p260 = scmp.lt.s32.totalorder %s23, 3
          %s261 = scalar_select %p260, %s23, 3
          %s262 = smul.addr %s261, 8
          %s263 = scalar_lea.vmem %s4, %s262
        $region40: #{tpu_custom_call.1} parent=19 // pred_fallthru
          _
      $region20: #{tpu_custom_call.1} parent=5 // pred_fallthru
        _
      %p264 = scmp.le.s32.totalorder 1, %s15
      %p265 = scmp.lt.s32.totalorder %s15, 9
      %p266 = pnand %p264, %p265
      %p267 = pneg %p266
      // Predicated region
      $region41: #{tpu_custom_call.1} parent=5 // pred_check
        _
      $region42: #{tpu_custom_call.1} parent=5 // pred_check_branch
        %269 = sbr.rel (%p266) target = $region44
      $region43: #{tpu_custom_call.1} parent=5 // pred_region
        %s270 = ssub.s32 %s15, 1
        %p271 = scmp.lt.s32.totalorder %s24, 1
        %s272 = scalar_select %p271, %s24, 1
        %s273 = smul.addr %s272, 8
        %s274 = scalar_lea.vmem %s0, %s273
        %p275 = pneg %p53
        %p276 = pneg %p50
        %p277 = scmp.lt.s32.totalorder %s25, 3
        %s278 = scalar_select %p277, %s25, 3
        %s279 = smul.addr %s278, 4
        %s280 = smul.addr %s279, 8
        %s281 = scalar_lea.vmem %s1, %s280
        %p282 = pneg %p79
        %p283 = pneg %p76
        %p284 = scmp.lt.s32.totalorder %s25, 3
        %s285 = scalar_select %p284, %s25, 3
        %s286 = smul.addr %s285, 4
        %s287 = smul.addr %s286, 8
        %s288 = scalar_lea.vmem %s2, %s287
        %p289 = pneg %p105
        %p290 = pneg %p102
        %p291 = scmp.lt.s32.totalorder %s25, 3
        %s292 = scalar_select %p291, %s25, 3
        %s293 = smul.addr %s292, 4
        %s294 = smul.addr %s293, 8
        %s295 = scalar_lea.vmem %s3, %s294
        %p296 = pneg %p131
        %p297 = pneg %p128
        %p298 = scmp.lt.s32.totalorder %s25, 3
        %s299 = scalar_select %p298, %s25, 3
        %s300 = smul.addr %s299, 8
        %s301 = scalar_lea.vmem %s4, %s300
        %p302 = pneg %p157
        %p303 = pneg %p154
        %p304 = pneg %p178
        %p305 = pneg %p175
        %p306 = pneg %p204
        %p307 = pneg %p201
        %s308 = sand.u32 %s191, 1
        %s309 = scalar_lea.sflag [#allocation4], %s308
        %s310 = sand.u32 %s191, 1
        %s311 = smul.addr %s310, 8
        %s312 = scalar_lea.vmem [#allocation3], %s311
        %p313 = scmp.lt.s32.totalorder %s24, 1
        %s314 = scalar_select %p313, %s24, 1
        %s315 = smul.addr %s314, 8
        %s316 = scalar_lea.vmem %s0, %s315
        %p317 = scmp.lt.s32.totalorder %s25, 3
        %s318 = scalar_select %p317, %s25, 3
        %s319 = smul.addr %s318, 4
        %s320 = smul.addr %s319, 8
        %s321 = scalar_lea.vmem %s1, %s320
        %p322 = scmp.lt.s32.totalorder %s25, 3
        %s323 = scalar_select %p322, %s25, 3
        %s324 = smul.addr %s323, 4
        %s325 = smul.addr %s324, 8
        %s326 = scalar_lea.vmem %s2, %s325
        %p327 = scmp.lt.s32.totalorder %s25, 3
        %s328 = scalar_select %p327, %s25, 3
        %s329 = smul.addr %s328, 4
        %s330 = smul.addr %s329, 8
        %s331 = scalar_lea.vmem %s3, %s330
        %p332 = scmp.lt.s32.totalorder %s25, 3
        %s333 = scalar_select %p332, %s25, 3
        %s334 = smul.addr %s333, 8
        %s335 = scalar_lea.vmem %s4, %s334
        %p336 = scmp.eq.s32.totalorder %s25, 0
        // Predicated region
        $region45: #{tpu_custom_call.1} parent=43 // pred_check
          %p337 = pneg %p336
        $region46: #{tpu_custom_call.1} parent=43 // pred_check_branch
          %339 = sbr.rel (%p337) target = $region48
        $region47: #{tpu_custom_call.1} parent=43 // pred_region
          %v340 = vld [vmem:[%s5] sm:$0x1]
          %v342 = vperm.slane %v340, 0
          %v344 = vadd.f32 %v342, 0.0
          %vm345 = vcmask 261120
          %346 = vst.msk [vmem:[#allocation2] sm:$0xff] %vm345, %v344
        $region48: #{tpu_custom_call.1} parent=43 // pred_fallthru
          _
        %v347 = vld [vmem:[%s316] sm:$0xff]
        %v348 = vld [vmem:[%s321] sm:$0xff]
        %v349 = vld [vmem:[%s321 + $0x8] sm:$0xff]
        %v350 = vld [vmem:[%s321 + $0x10] sm:$0xff]
        %v351 = vld [vmem:[%s321 + $0x18] sm:$0xff]
        %vm352 = vcmask 261120
        %v354 = vsel %vm352, %v347, 0
        %356 = vmatpush.msra.mxu0 0.0
        %357 = vmatpush.msra.mxu0 0.0
        %358 = vmatpush.msra.mxu0 0.0
        %359 = vmatpush.msra.mxu0 0.0
        %360 = vmatpush.msra.mxu0 0.0
        %361 = vmatpush.msra.mxu0 0.0
        %362 = vmatpush.msra.mxu0 0.0
        %363 = vmatpush.msra.mxu0 0.0
        %364 = vmatpush.msra.mxu0 0.0
        %365 = vmatpush.msra.mxu0 0.0
        %366 = vmatpush.msra.mxu0 0.0
        %367 = vmatpush.msra.mxu0 0.0
        %368 = vmatpush.msra.mxu0 %v351
        %369 = vmatpush.msra.mxu0 %v350
        %370 = vmatpush.msra.mxu0 %v349
        %371 = vmatpush.msra.mxu0 %v348
        %372 = vmatmul.f32.gmra.mxu0 %v354
        %v373 = vpop.f32.mrf.mxu0
        %v374 = vadd.f32 0.0, %v373
        %375 = vdwg.mxu0
        %v376 = vld [vmem:[%s326] sm:$0xff]
        %v377 = vld [vmem:[%s326 + $0x8] sm:$0xff]
        %v378 = vld [vmem:[%s326 + $0x10] sm:$0xff]
        %v379 = vld [vmem:[%s326 + $0x18] sm:$0xff]
        %380 = vmatpush.msra.mxu0 0.0
        %381 = vmatpush.msra.mxu0 0.0
        %382 = vmatpush.msra.mxu0 0.0
        %383 = vmatpush.msra.mxu0 0.0
        %384 = vmatpush.msra.mxu0 0.0
        %385 = vmatpush.msra.mxu0 0.0
        %386 = vmatpush.msra.mxu0 0.0
        %387 = vmatpush.msra.mxu0 0.0
        %388 = vmatpush.msra.mxu0 0.0
        %389 = vmatpush.msra.mxu0 0.0
        %390 = vmatpush.msra.mxu0 0.0
        %391 = vmatpush.msra.mxu0 0.0
        %392 = vmatpush.msra.mxu0 %v379
        %393 = vmatpush.msra.mxu0 %v378
        %394 = vmatpush.msra.mxu0 %v377
        %395 = vmatpush.msra.mxu0 %v376
        %396 = vmatmul.f32.gmra.mxu0 %v354
        %v397 = vpop.f32.mrf.mxu0
        %v398 = vadd.f32 0.0, %v397
        %399 = vdwg.mxu0
        %v400 = vld [vmem:[%s331] sm:$0xff]
        %v401 = vld [vmem:[%s331 + $0x8] sm:$0xff]
        %v402 = vld [vmem:[%s331 + $0x10] sm:$0xff]
        %v403 = vld [vmem:[%s331 + $0x18] sm:$0xff]
        %404 = vmatpush.msra.mxu0 0.0
        %405 = vmatpush.msra.mxu0 0.0
        %406 = vmatpush.msra.mxu0 0.0
        %407 = vmatpush.msra.mxu0 0.0
        %408 = vmatpush.msra.mxu0 0.0
        %409 = vmatpush.msra.mxu0 0.0
        %410 = vmatpush.msra.mxu0 0.0
        %411 = vmatpush.msra.mxu0 0.0
        %412 = vmatpush.msra.mxu0 0.0
        %413 = vmatpush.msra.mxu0 0.0
        %414 = vmatpush.msra.mxu0 0.0
        %415 = vmatpush.msra.mxu0 0.0
        %416 = vmatpush.msra.mxu0 %v403
        %417 = vmatpush.msra.mxu0 %v402
        %418 = vmatpush.msra.mxu0 %v401
        %419 = vmatpush.msra.mxu0 %v400
        %420 = vmatmul.f32.gmra.mxu0 %v354
        %v421 = vpop.f32.mrf.mxu0
        %v422 = vadd.f32 0.0, %v421
        %423 = vdwg.mxu0
        %vm424 = vcmask 64512
        %v426 = vsel %vm424, %v374, 0
        %v429 = vsel %vm424, %v398, 0
        %431 = vmatpush.xpose.msra.mxu0 0.0
        %432 = vmatpush.xpose.msra.mxu0 0.0
        %433 = vmatpush.xpose.msra.mxu0 0.0
        %434 = vmatpush.xpose.msra.mxu0 0.0
        %435 = vmatpush.xpose.msra.mxu0 0.0
        %436 = vmatpush.xpose.msra.mxu0 0.0
        %437 = vmatpush.xpose.msra.mxu0 0.0
        %438 = vmatpush.xpose.msra.mxu0 0.0
        %439 = vmatpush.xpose.msra.mxu0 0.0
        %440 = vmatpush.xpose.msra.mxu0 0.0
        %441 = vmatpush.xpose.msra.mxu0 0.0
        %442 = vmatpush.xpose.msra.mxu0 0.0
        %443 = vmatpush.xpose.msra.mxu0 0.0
        %444 = vmatpush.xpose.msra.mxu0 0.0
        %445 = vmatpush.xpose.msra.mxu0 0.0
        %446 = vmatpush.xpose.msra.mxu0 %v429
        %447 = vmatmul.f32.gmra.mxu0 %v426
        %v448 = vpop.f32.mrf.mxu0
        %v449 = vadd.f32 0.0, %v448
        %450 = vdwg.mxu0
        %v451 = vsel %vm424, %v449, -inf
        %452 = vmax.xlane.f32.xlu0 %v451
        %v453 = vpop.xlane.xlu0 %452
        %v454 = vsub.f32 %v449, %v453
        %v455 = vmul.f32 %v454, 1.442695
        %v456 = vpow.pop %v455
        %v457 = vsel %vm424, %v456, 0.0
        %458 = vadd.xlane.f32.xlu0 %v457
        %v459 = vpop.xlane.xlu0 %458
        %v460 = vrcp.pop %v459
        %v461 = vmul.f32 %v456, %v460
        %v463 = vsel %vm424, %v461, 0
        %465 = vmatpush.msra.mxu0 0.0
        %466 = vmatpush.msra.mxu0 0.0
        %467 = vmatpush.msra.mxu0 0.0
        %468 = vmatpush.msra.mxu0 0.0
        %469 = vmatpush.msra.mxu0 0.0
        %470 = vmatpush.msra.mxu0 0.0
        %471 = vmatpush.msra.mxu0 0.0
        %472 = vmatpush.msra.mxu0 0.0
        %473 = vmatpush.msra.mxu0 0.0
        %474 = vmatpush.msra.mxu0 0.0
        %475 = vmatpush.msra.mxu0 0.0
        %476 = vmatpush.msra.mxu0 0.0
        %477 = vmatpush.msra.mxu0 0.0
        %478 = vmatpush.msra.mxu0 0.0
        %479 = vmatpush.msra.mxu0 0.0
        %480 = vmatpush.msra.mxu0 %v422
        %481 = vmatmul.f32.gmra.mxu0 %v463
        %v482 = vpop.f32.mrf.mxu0
        %v483 = vadd.f32 0.0, %v482
        %484 = vdwg.mxu0
        %v485 = vld [vmem:[#allocation2] sm:$0xff]
        %v486 = vld [vmem:[%s335] sm:$0xff]
        %v488 = vsel %vm424, %v483, 0
        %490 = vmatpush.msra.mxu0 0.0
        %491 = vmatpush.msra.mxu0 0.0
        %492 = vmatpush.msra.mxu0 0.0
        %493 = vmatpush.msra.mxu0 0.0
        %494 = vmatpush.msra.mxu0 0.0
        %495 = vmatpush.msra.mxu0 0.0
        %496 = vmatpush.msra.mxu0 0.0
        %497 = vmatpush.msra.mxu0 0.0
        %498 = vmatpush.msra.mxu0 0.0
        %499 = vmatpush.msra.mxu0 0.0
        %500 = vmatpush.msra.mxu0 0.0
        %501 = vmatpush.msra.mxu0 0.0
        %502 = vmatpush.msra.mxu0 0.0
        %503 = vmatpush.msra.mxu0 0.0
        %504 = vmatpush.msra.mxu0 0.0
        %505 = vmatpush.msra.mxu0 %v486
        %506 = vmatmul.f32.gmra.mxu0 %v488
        %v507 = vpop.f32.mrf.mxu0
        %v508 = vadd.f32 0.0, %v507
        %509 = vdwg.mxu0
        %v510 = vadd.f32 %v485, %v508
        %511 = vst.msk [vmem:[#allocation2] sm:$0xff] %vm352, %v510
        %p512 = scmp.eq.s32.totalorder %s25, 3
        // Predicated region
        $region49: #{tpu_custom_call.1} parent=43 // pred_check
          %p513 = pneg %p512
        $region50: #{tpu_custom_call.1} parent=43 // pred_check_branch
          %515 = sbr.rel (%p513) target = $region52
        $region51: #{tpu_custom_call.1} parent=43 // pred_region
          %v516 = vld [vmem:[#allocation2] sm:$0xff]
          %517 = vst.msk [vmem:[%s312] sm:$0xff] %vm352, %v516
        $region52: #{tpu_custom_call.1} parent=43 // pred_fallthru
          _
        %s518 = sand.u32 %s191, 1
        %s519 = scalar_lea.sflag [#allocation4], %s518
        %s520 = sand.u32 %s191, 1
        %s521 = smul.addr %s520, 8
        %s522 = scalar_lea.vmem [#allocation3], %s521
        // Predicated region
        $region53: #{tpu_custom_call.1} parent=43 // pred_check
          %p523 = pneg %p201
        $region54: #{tpu_custom_call.1} parent=43 // pred_check_branch
          %525 = sbr.rel (%p523) target = $region56
        $region55: #{tpu_custom_call.1} parent=43 // pred_region
          %527 = vsyncadd %s519, 0
          %s528 = smul.addr %s24, 8
          %s529 = scalar_lea.hbm %s6, %s528
          %s531 = sshll.u32 %s522, 4
          %s532 = int_to_ptr.vmem [resolvable:$true] %s531
          %s533 = sshll.u32 %s529, 4
          %s534 = int_to_ptr.hbm [resolvable:$true] %s533
          %536 = dma.vmem_to_hbm [thread:$0]  %s532, 128, %s534, %s519
        $region56: #{tpu_custom_call.1} parent=43 // pred_fallthru
          _
      $region44: #{tpu_custom_call.1} parent=5 // pred_fallthru
        _
      %p537 = scmp.le.s32.totalorder 2, %s15
      // Predicated region
      $region57: #{tpu_custom_call.1} parent=5 // pred_check
        %p538 = pneg %p537
      $region58: #{tpu_custom_call.1} parent=5 // pred_check_branch
        %540 = sbr.rel (%p538) target = $region60
      $region59: #{tpu_custom_call.1} parent=5 // pred_region
        %s541 = ssub.s32 %s15, 2
        // Predicated region
        $region61: #{tpu_custom_call.1} parent=59 // pred_check
          %p542 = pneg %p207
        $region62: #{tpu_custom_call.1} parent=59 // pred_check_branch
          %544 = sbr.rel (%p542) target = $region64
        $region63: #{tpu_custom_call.1} parent=59 // pred_region
          %s545 = sand.u32 %s192, 1
          %s546 = scalar_lea.sflag [#allocation4], %s545
          %s547 = sand.u32 %s192, 1
          %s548 = smul.addr %s547, 8
          %s549 = scalar_lea.vmem [#allocation3], %s548
          %551 = dma.done %s546, 128
        $region64: #{tpu_custom_call.1} parent=59 // pred_fallthru
          _
      $region60: #{tpu_custom_call.1} parent=5 // pred_fallthru
        _
    $region6: #{tpu_custom_call.1} parent=1 // loop_footer
      %s19 = sadd.s32 1, %s15
    $region7: #{tpu_custom_call.1} parent=1 // loop_footer_branch
      %14 = sbr.rel target = $region3
    $region8: #{tpu_custom_call.1} parent=1 // loop_exit
      _
    %552 = vsyncpa [#allocation4], 1
    %s553 = scalar_lea.sflag [#allocation4], 1
    %554 = vsyncpa %s553, 1

</llo_original>
